<compile_context>
chip_gen: v6e
topology: v6e:2x2x1
jax: 0.10.0
libtpu: 0.0.40
codegen_flags: <defaults>
</compile_context>

<pallas_src>
import math

import jax
import jax.numpy as jnp
from jax.experimental import pallas as pl
from jax.experimental.pallas import tpu as pltpu


# ---------------------------------------------------------------------------
# Kernel helpers
# ---------------------------------------------------------------------------
def _rotate_pairs(x, c, sn, sp):
    """Adjacent-pair Givens rotation along the lane axis.

    even lane p: cos*x_p - sin*x_{p+1}    (sp is zero on even lanes)
    odd  lane p: cos*x_p + sin*x_{p-1}    (sn is zero on odd  lanes)

    The pltpu.roll wrap-around lanes land only where the corresponding masked sin
    vector is zero (width is even), so plain rolls are numerically exact.
    Returns f32.
    """
    xf = x.astype(jnp.float32)
    d = xf.shape[-1]
    nxt = pltpu.roll(xf, shift=d - 1, axis=1)   # nxt[:, p] = x[:, (p + 1) % d]
    prv = pltpu.roll(xf, shift=1, axis=1)       # prv[:, p] = x[:, (p - 1) % d]
    return c * xf + sn * nxt + sp * prv


def _kac_linear_kernel_fullk(x_ref, c_ref, sn_ref, sp_ref, wt_ref, b_ref, o_ref):
    """2-D grid (i, j): full-K weight block, no reduction axis, no scratch."""
    y = _rotate_pairs(x_ref[...], c_ref[...], sn_ref[...], sp_ref[...])
    acc = jnp.dot(y.astype(jnp.bfloat16), wt_ref[...],
                  preferred_element_type=jnp.float32)
    o_ref[...] = (acc + b_ref[...]).astype(o_ref.dtype)


def _kac_linear_kernel_tiledk(x_ref, c_ref, sn_ref, sp_ref, wt_ref, b_ref, o_ref,
                              acc_ref):
    """3-D grid (i, j, k): per-slice just-in-time rotation + f32 accumulator over k."""
    k = pl.program_id(2)
    tk = wt_ref.shape[0]
    off = pl.multiple_of(k * tk, tk)

    x_blk = x_ref[:, pl.ds(off, tk)]                       # (tm, tk) bf16
    y = _rotate_pairs(x_blk, c_ref[...], sn_ref[...], sp_ref[...])

    @pl.when(k == 0)
    def _():
        acc_ref[...] = jnp.zeros_like(acc_ref)

    acc_ref[...] += jnp.dot(y.astype(jnp.bfloat16), wt_ref[...],
                            preferred_element_type=jnp.float32)

    @pl.when(k == pl.num_programs(2) - 1)
    def _():
        o_ref[...] = (acc_ref[...] + b_ref[...]).astype(o_ref.dtype)


# ---------------------------------------------------------------------------
# Host-side wrappers
# ---------------------------------------------------------------------------
def prepare_precomposed_kac_params(theta, w, b):
    """One-time parameter preprocessing (out of the hot path):
    masked cos/sin vectors, W pre-cast to bf16 and pre-transposed to (D, D_out)."""
    d2 = theta.shape[0]
    D = 2 * d2
    D_out = w.shape[0]
    assert w.shape == (D_out, D) and b.shape == (D_out,)

    ct = jnp.cos(theta.astype(jnp.float32))
    st = jnp.sin(theta.astype(jnp.float32))
    z = jnp.zeros_like(st)
    c = jnp.repeat(ct, 2).reshape(1, D)                         # cos per feature
    s_nxt = jnp.stack([-st, z], axis=-1).reshape(1, D)          # -sin even / 0 odd
    s_prv = jnp.stack([z, st], axis=-1).reshape(1, D)           # 0 even / +sin odd

    w_t = jnp.transpose(jnp.asarray(w, jnp.bfloat16))           # (D, D_out) bf16
    b2 = jnp.asarray(b, jnp.float32).reshape(1, D_out)
    return dict(c=c, s_nxt=s_nxt, s_prv=s_prv, w_t=w_t, b2=b2)


def _pick_tile(full, requested, align):
    """Largest tile <= requested that divides `full` and is a multiple of `align`,
    falling back to the full (always legal) dimension."""
    if requested >= full:
        return full
    t = (min(requested, full) // align) * align
    while t >= align:
        if full % t == 0:
            return t
        t -= align
    return full


def precomposed_kac_forward(x, params, *, tm=512, tn=256, tk=2048,
                            out_dtype=None, vmem_budget_bytes=48 * 1024 * 1024,
                            fold_k=None):
    """layer(kac_layer(x)): adjacent-pair Givens rotation followed by Linear."""
    c, s_nxt, s_prv, w_t, b2 = (params["c"], params["s_nxt"], params["s_prv"],
                                params["w_t"], params["b2"])
    B, D = x.shape
    Dw, D_out = w_t.shape
    assert Dw == D and D % 2 == 0
    assert c.shape == (1, D) and b2.shape == (1, D_out)

    if out_dtype is None:
        out_dtype = x.dtype
    out_isz = jnp.dtype(out_dtype).itemsize

    tm = _pick_tile(B, tm, 8)
    tn = _pick_tile(D_out, tn, 128)

    x_bf16 = x.astype(jnp.bfloat16)   # halves x HBM traffic + x VMEM footprint

    # VMEM working-set estimates (double-buffered DMA blocks + f32 roll temporaries).
    def _est_fold():
        return (2 * tm * D * 2 + 2 * D * tn * 2 + 2 * tm * tn * out_isz
                + 2 * (3 * D * 4 + tn * 4) + 4 * tm * D * 4)

    def _est_tiled(tm_, tk_):
        return (2 * tm_ * D * 2 + 2 * tk_ * tn * 2 + 2 * tm_ * tn * out_isz
                + tm_ * tn * 4 + 2 * (3 * tk_ * 4 + tn * 4) + 4 * tm_ * tk_ * 4)

    if fold_k is None:
        fold_k = _est_fold() <= vmem_budget_bytes

    if fold_k:
        est = _est_fold()
        grid = (B // tm, D_out // tn)
        in_specs = [
            pl.BlockSpec((tm, D), lambda i, j: (i, 0)),    # x row tile (bf16)
            pl.BlockSpec((1, D), lambda i, j: (0, 0)),     # cos
            pl.BlockSpec((1, D), lambda i, j: (0, 0)),     # -sin (even lanes)
            pl.BlockSpec((1, D), lambda i, j: (0, 0)),     # +sin (odd lanes)
            pl.BlockSpec((D, tn), lambda i, j: (0, j)),    # W^T tile (full K)
            pl.BlockSpec((1, tn), lambda i, j: (0, j)),    # bias tile
        ]
        out_specs = pl.BlockSpec((tm, tn), lambda i, j: (i, j))
        scratch = []
        kernel = _kac_linear_kernel_fullk
        dims = ("parallel", "parallel")
    else:
        tk = _pick_tile(D, tk, 128)
        while _est_tiled(tm, tk) > vmem_budget_bytes and tk > 128:
            new_tk = _pick_tile(D, tk // 2, 128)
            if new_tk >= tk:
                break
            tk = new_tk
        while _est_tiled(tm, tk) > vmem_budget_bytes and tm > 8:
            new_tm = _pick_tile(B, tm // 2, 8)
            if new_tm >= tm:
                break
            tm = new_tm
        est = _est_tiled(tm, tk)
        grid = (B // tm, D_out // tn, D // tk)
        in_specs = [
            pl.BlockSpec((tm, D), lambda i, j, k: (i, 0)),   # x row (once per i)
            pl.BlockSpec((1, tk), lambda i, j, k: (0, k)),   # cos slice
            pl.BlockSpec((1, tk), lambda i, j, k: (0, k)),   # -sin slice
            pl.BlockSpec((1, tk), lambda i, j, k: (0, k)),   # +sin slice
            pl.BlockSpec((tk, tn), lambda i, j, k: (k, j)),  # W^T tile
            pl.BlockSpec((1, tn), lambda i, j, k: (0, j)),   # bias tile
        ]
        out_specs = pl.BlockSpec((tm, tn), lambda i, j, k: (i, j))
        scratch = [pltpu.VMEM((tm, tn), jnp.float32)]
        kernel = _kac_linear_kernel_tiledk
        dims = ("parallel", "parallel", "arbitrary")

    vmem_limit = int(min(max(est + (8 << 20), 32 << 20), 96 << 20))

    n_batch_tiles = B // tm
    cost = pl.CostEstimate(
        flops=2 * B * D * D_out + 8 * B * D * (D_out // tn),
        transcendentals=0,
        bytes_accessed=int(B * D * 2                       # bf16 x
                           + n_batch_tiles * D * D_out * 2 # bf16 W^T restream per i
                           + B * D_out * out_isz           # output
                           + 3 * D * 4 + D_out * 4))       # cos/sin/bias

    return pl.pallas_call(
        kernel,
        out_shape=jax.ShapeDtypeStruct((B, D_out), out_dtype),
        grid_spec=pltpu.PrefetchScalarGridSpec(
            num_scalar_prefetch=0,
            grid=grid,
            in_specs=in_specs,
            out_specs=out_specs,
            scratch_shapes=scratch,
        ),
        compiler_params=pltpu.CompilerParams(
            dimension_semantics=dims,
            vmem_limit_bytes=vmem_limit),
        cost_estimate=cost,
    )(x_bf16, c, s_nxt, s_prv, w_t, b2)


def _reference(x, theta, w, b):
    """Pure-JAX f32 reference of layer(kac_layer(x))."""
    B, D = x.shape
    xp = x.reshape(B, D // 2, 2)
    ct, st = jnp.cos(theta), jnp.sin(theta)
    y_even = ct[None, :] * xp[:, :, 0] - st[None, :] * xp[:, :, 1]
    y_odd = st[None, :] * xp[:, :, 0] + ct[None, :] * xp[:, :, 1]
    y = jnp.stack([y_even, y_odd], axis=-1).reshape(B, D)
    return y @ w.T + b[None, :]


if __name__ == "__main__":
    B, D, D_out = 16, 256, 128   # small, lane-aligned demo shape

    key = jax.random.PRNGKey(0)
    k_x, k_theta, k_w, k_b = jax.random.split(key, 4)

    x = jax.random.normal(k_x, (B, D), dtype=jnp.float32)
    # kac_layer params: one rotation angle per adjacent feature pair.
    theta = jax.random.uniform(k_theta, (D // 2,), jnp.float32, 0.0, 2.0 * math.pi)
    # layer params: nn.Linear(D, D_out)-style uniform init.
    bound = 1.0 / math.sqrt(D)
    w = jax.random.uniform(k_w, (D_out, D), jnp.float32, -bound, bound)
    b = jax.random.uniform(k_b, (D_out,), jnp.float32, -bound, bound)

    params = prepare_precomposed_kac_params(theta, w, b)   # one-time preprocessing
    ref = _reference(x, theta, w, b)

    # Folded-K (2-D grid) path — the default for shapes that fit VMEM.
    out = precomposed_kac_forward(x, params)
    out = jax.block_until_ready(out)
    assert out.shape == (B, D_out)
    assert jnp.allclose(out, ref, atol=2.5e-2, rtol=2.5e-2), "fold-K mismatch vs reference"

    # Tiled-K (3-D grid) fallback path, exercised explicitly at small tiles.
    out2 = precomposed_kac_forward(x, params, tm=8, tk=128, fold_k=False)
    out2 = jax.block_until_ready(out2)
    assert jnp.allclose(out2, ref, atol=2.5e-2, rtol=2.5e-2), "tiled-K mismatch vs reference"

    print("KERNEL_OK")
</pallas_src>

<mosaic_0001>
module attributes {stable_mosaic.version = 11 : i64} {
  func.func @_kac_linear_kernel_fullk(%arg0: i32, %arg1: i32, %arg2: memref<16x256xbf16, #tpu.memory_space<vmem>>, %arg3: memref<1x256xf32, #tpu.memory_space<vmem>>, %arg4: memref<1x256xf32, #tpu.memory_space<vmem>>, %arg5: memref<1x256xf32, #tpu.memory_space<vmem>>, %arg6: memref<256x128xbf16, #tpu.memory_space<vmem>>, %arg7: memref<1x128xf32, #tpu.memory_space<vmem>>, %arg8: memref<16x128xf32, #tpu.memory_space<vmem>>) attributes {dimension_semantics = [#tpu.dimension_semantics<parallel>, #tpu.dimension_semantics<parallel>], iteration_bounds = array<i64: 1, 1>, scalar_prefetch = 0 : i64, scratch_operands = 0 : i64, tpu.core_type = #tpu.core_type<tc>, window_params = [{transform_indices = @transform_0, window_bounds = array<i64: 16, 256>}, {pipeline_mode = #tpu.pipeline_mode<synchronous>, transform_indices = @transform_1, window_bounds = array<i64: 1, 256>}, {pipeline_mode = #tpu.pipeline_mode<synchronous>, transform_indices = @transform_2, window_bounds = array<i64: 1, 256>}, {pipeline_mode = #tpu.pipeline_mode<synchronous>, transform_indices = @transform_3, window_bounds = array<i64: 1, 256>}, {transform_indices = @transform_4, window_bounds = array<i64: 256, 128>}, {transform_indices = @transform_5, window_bounds = array<i64: 1, 128>}, {transform_indices = @transform_6, window_bounds = array<i64: 16, 128>}]} {
    %c0 = arith.constant 0 : index
    %c0_0 = arith.constant 0 : index
    %0 = vector.load %arg2[%c0, %c0_0] : memref<16x256xbf16, #tpu.memory_space<vmem>>, vector<16x256xbf16>
    %c0_1 = arith.constant 0 : index
    %c0_2 = arith.constant 0 : index
    %1 = vector.load %arg3[%c0_1, %c0_2] : memref<1x256xf32, #tpu.memory_space<vmem>>, vector<1x256xf32>
    %c0_3 = arith.constant 0 : index
    %c0_4 = arith.constant 0 : index
    %2 = vector.load %arg4[%c0_3, %c0_4] : memref<1x256xf32, #tpu.memory_space<vmem>>, vector<1x256xf32>
    %c0_5 = arith.constant 0 : index
    %c0_6 = arith.constant 0 : index
    %3 = vector.load %arg5[%c0_5, %c0_6] : memref<1x256xf32, #tpu.memory_space<vmem>>, vector<1x256xf32>
    %4 = arith.extf %0 : vector<16x256xbf16> to vector<16x256xf32>
    %c255_i32 = arith.constant 255 : i32
    %5 = tpu.dynamic_rotate %4 by %c255_i32 dim 1 : vector<16x256xf32>, i32 -> vector<16x256xf32>
    %c1_i32 = arith.constant 1 : i32
    %6 = tpu.dynamic_rotate %4 by %c1_i32 dim 1 : vector<16x256xf32>, i32 -> vector<16x256xf32>
    %7 = vector.broadcast %1 : vector<1x256xf32> to vector<16x256xf32>
    %8 = arith.mulf %7, %4 : vector<16x256xf32>
    %9 = vector.broadcast %2 : vector<1x256xf32> to vector<16x256xf32>
    %10 = arith.mulf %9, %5 : vector<16x256xf32>
    %11 = arith.addf %8, %10 : vector<16x256xf32>
    %12 = vector.broadcast %3 : vector<1x256xf32> to vector<16x256xf32>
    %13 = arith.mulf %12, %6 : vector<16x256xf32>
    %14 = arith.addf %11, %13 : vector<16x256xf32>
    %15 = arith.truncf %14 : vector<16x256xf32> to vector<16x256xbf16>
    %c0_7 = arith.constant 0 : index
    %c0_8 = arith.constant 0 : index
    %16 = vector.load %arg6[%c0_7, %c0_8] : memref<256x128xbf16, #tpu.memory_space<vmem>>, vector<256x128xbf16>
    %cst = arith.constant dense<0.000000e+00> : vector<16x128xf32>
    %17 = tpu.matmul %15, %16, %cst {dimension_numbers = #tpu.dot_dimension_numbers<[1], [0], [0], [1], [0, 0, 1, 1], [], []>} : vector<16x256xbf16>, vector<256x128xbf16>, vector<16x128xf32> -> vector<16x128xf32>
    %c0_9 = arith.constant 0 : index
    %c0_10 = arith.constant 0 : index
    %18 = vector.load %arg7[%c0_9, %c0_10] : memref<1x128xf32, #tpu.memory_space<vmem>>, vector<1x128xf32>
    %19 = vector.broadcast %18 : vector<1x128xf32> to vector<16x128xf32>
    %20 = arith.addf %17, %19 : vector<16x128xf32>
    %c0_11 = arith.constant 0 : index
    %c0_12 = arith.constant 0 : index
    %21 = vector.load %arg8[%c0_11, %c0_12] : memref<16x128xf32, #tpu.memory_space<vmem>>, vector<16x128xf32>
    tpu.vector_store %arg8[%c0_11, %c0_12], %20 {strides = array<i32>} : memref<16x128xf32, #tpu.memory_space<vmem>>, vector<16x128xf32>,
    return
  }
  func.func @transform_0(%arg0: i32, %arg1: i32) -> (i32, i32) {
    %c0_i32 = arith.constant 0 : i32
    %c0_i32_0 = arith.constant 0 : i32
    return %arg0, %c0_i32 : i32, i32
  }
  func.func @transform_1(%arg0: i32, %arg1: i32) -> (i32, i32) {
    %c0_i32 = arith.constant 0 : i32
    %c0_i32_0 = arith.constant 0 : i32
    %c0_i32_1 = arith.constant 0 : i32
    return %c0_i32, %c0_i32_0 : i32, i32
  }
  func.func @transform_2(%arg0: i32, %arg1: i32) -> (i32, i32) {
    %c0_i32 = arith.constant 0 : i32
    %c0_i32_0 = arith.constant 0 : i32
    %c0_i32_1 = arith.constant 0 : i32
    return %c0_i32, %c0_i32_0 : i32, i32
  }
  func.func @transform_3(%arg0: i32, %arg1: i32) -> (i32, i32) {
    %c0_i32 = arith.constant 0 : i32
    %c0_i32_0 = arith.constant 0 : i32
    %c0_i32_1 = arith.constant 0 : i32
    return %c0_i32, %c0_i32_0 : i32, i32
  }
  func.func @transform_4(%arg0: i32, %arg1: i32) -> (i32, i32) {
    %c0_i32 = arith.constant 0 : i32
    %c0_i32_0 = arith.constant 0 : i32
    return %c0_i32, %arg1 : i32, i32
  }
  func.func @transform_5(%arg0: i32, %arg1: i32) -> (i32, i32) {
    %c0_i32 = arith.constant 0 : i32
    %c0_i32_0 = arith.constant 0 : i32
    return %c0_i32, %arg1 : i32, i32
  }
  func.func @transform_6(%arg0: i32, %arg1: i32) -> (i32, i32) {
    %c0_i32 = arith.constant 0 : i32
    return %arg0, %arg1 : i32, i32
  }
}

</mosaic_0001>

<llo_original>
// kernel: tpu_custom_call.1
$region0: #{tpu_custom_call.1}
  #allocation0 [shape = 'u32[]', space=smem, size = 0x4, offset = 0x4, fixed_abs, tag = 'smem constant byte address 0x4 - core index']
  #allocation1 [shape = 'u32[144,128]{1,0:T(1,128)}', space=vmem, size = 0x12000, scoped, tag = 'internal scratch']
  %s0 = inlined_call_operand.hbm [shape: bf16[16,256], index: 0, kind: input, shape index: {}]
  %s1 = inlined_call_operand.hbm [shape: f32[1,256], index: 1, kind: input, shape index: {}]
  %s2 = inlined_call_operand.vmem [shape: f32[1,256], index: 2, kind: input, shape index: {}]
  %s3 = inlined_call_operand.vmem [shape: f32[1,256], index: 3, kind: input, shape index: {}]
  %s4 = inlined_call_operand.hbm [shape: bf16[256,128], index: 4, kind: input, shape index: {}]
  %s5 = inlined_call_operand.vmem [shape: f32[1,128], index: 5, kind: input, shape index: {}]
  %s6 = inlined_call_operand.hbm [shape: f32[16,128], index: 6, kind: output, shape index: {}]
  %s7 = sld [smem:[#allocation0]]
  $region46: #{tpu_custom_call.1} parent=0
    _
  %s9 = ssub.s32 1, %s7
  %s10 = scalar_select 0, %s9, %s7
  $region1: #{tpu_custom_call.1} parent=0
    #allocation2 [shape = 'u8[8192]{0}', space=vmem, size = 0x2000, scoped, tag = 'input window, operand 0, single buffered']
    #allocation3 [shape = 's32[1]{0}', space=sflag, size = 0x4, scoped, tag = 'scoped memory for tpu_custom_call.1']
    #allocation4 [shape = 's32[1]{0}', space=sflag, size = 0x4, scoped, tag = 'scoped memory for tpu_custom_call.1']
    #allocation5 [shape = 'u8[1024]{0}', space=vmem, size = 0x400, scoped, tag = 'input window, operand 1, single buffered']
    #allocation6 [shape = 's32[1]{0}', space=sflag, size = 0x4, scoped, tag = 'scoped memory for tpu_custom_call.1']
    #allocation7 [shape = 'u8[65536]{0}', space=vmem, size = 0x10000, scoped, tag = 'input window, operand 4, single buffered']
    #allocation8 [shape = 'u8[8192]{0}', space=vmem, size = 0x2000, scoped, tag = 'output window, operand 0, single buffered']
    %11 = vsyncpa [#allocation3], 0
    %12 = vsyncpa [#allocation6], 0
    %13 = vsyncpa [#allocation4], 0
    // Predicated region
    $region2: #{tpu_custom_call.1} parent=1 // pred_check
      _
    $region3: #{tpu_custom_call.1} parent=1 // pred_check_branch
      %15 = sbr.rel (0) target = $region5
    $region4: #{tpu_custom_call.1} parent=1 // pred_region
      %s17 = ssub.s32 256, 256
      %18 = vsyncadd [#allocation3], %s17
      %s19 = sshll.u32 [#allocation2], 4
      %s20 = int_to_ptr.vmem [resolvable:$true] %s19
      %25 = dma.hbm_to_vmem [thread:$0]  %s0, 256, %s20, [#allocation3], 128, 128, 8
    $region5: #{tpu_custom_call.1} parent=1 // pred_fallthru
      _
    // Predicated region
    $region6: #{tpu_custom_call.1} parent=1 // pred_check
      _
    $region7: #{tpu_custom_call.1} parent=1 // pred_check_branch
      %27 = sbr.rel (0) target = $region9
    $region8: #{tpu_custom_call.1} parent=1 // pred_region
      %s29 = ssub.s32 32, 32
      %30 = vsyncadd [#allocation6], %s29
      %s32 = sshll.u32 [#allocation5], 4
      %s33 = int_to_ptr.vmem [resolvable:$true] %s32
      %35 = dma.hbm_to_vmem [thread:$0]  %s1, 32, %s33, [#allocation6]
    $region9: #{tpu_custom_call.1} parent=1 // pred_fallthru
      _
    // Predicated region
    $region10: #{tpu_custom_call.1} parent=1 // pred_check
      _
    $region11: #{tpu_custom_call.1} parent=1 // pred_check_branch
      %37 = sbr.rel (0) target = $region13
    $region12: #{tpu_custom_call.1} parent=1 // pred_region
      _
    $region13: #{tpu_custom_call.1} parent=1 // pred_fallthru
      _
    // Predicated region
    $region14: #{tpu_custom_call.1} parent=1 // pred_check
      _
    $region15: #{tpu_custom_call.1} parent=1 // pred_check_branch
      %39 = sbr.rel (0) target = $region17
    $region16: #{tpu_custom_call.1} parent=1 // pred_region
      _
    $region17: #{tpu_custom_call.1} parent=1 // pred_fallthru
      _
    // Predicated region
    $region18: #{tpu_custom_call.1} parent=1 // pred_check
      _
    $region19: #{tpu_custom_call.1} parent=1 // pred_check_branch
      %41 = sbr.rel (0) target = $region21
    $region20: #{tpu_custom_call.1} parent=1 // pred_region
      %s43 = ssub.s32 2048, 2048
      %44 = vsyncadd [#allocation6], %s43
      %s45 = sshll.u32 [#allocation7], 4
      %s46 = int_to_ptr.vmem [resolvable:$true] %s45
      %51 = dma.hbm_to_vmem [thread:$0]  %s4, 2048, %s46, [#allocation6], 64, 64, 4
    $region21: #{tpu_custom_call.1} parent=1 // pred_fallthru
      _
    // Predicated region
    $region22: #{tpu_custom_call.1} parent=1 // pred_check
      _
    $region23: #{tpu_custom_call.1} parent=1 // pred_check_branch
      %53 = sbr.rel (0) target = $region25
    $region24: #{tpu_custom_call.1} parent=1 // pred_region
      _
    $region25: #{tpu_custom_call.1} parent=1 // pred_fallthru
      _
    // Predicated region
    $region26: #{tpu_custom_call.1} parent=1 // pred_check
      _
    $region27: #{tpu_custom_call.1} parent=1 // pred_check_branch
      %55 = sbr.rel (0) target = $region29
    $region28: #{tpu_custom_call.1} parent=1 // pred_region
      %56 = dma.done [#allocation3], 256
    $region29: #{tpu_custom_call.1} parent=1 // pred_fallthru
      _
    // Predicated region
    $region30: #{tpu_custom_call.1} parent=1 // pred_check
      _
    $region31: #{tpu_custom_call.1} parent=1 // pred_check_branch
      %58 = sbr.rel (0) target = $region33
    $region32: #{tpu_custom_call.1} parent=1 // pred_region
      %59 = dma.done [#allocation6], 32
    $region33: #{tpu_custom_call.1} parent=1 // pred_fallthru
      _
    // Predicated region
    $region34: #{tpu_custom_call.1} parent=1 // pred_check
      _
    $region35: #{tpu_custom_call.1} parent=1 // pred_check_branch
      %61 = sbr.rel (0) target = $region37
    $region36: #{tpu_custom_call.1} parent=1 // pred_region
      %62 = dma.done [#allocation6], 2048
    $region37: #{tpu_custom_call.1} parent=1 // pred_fallthru
      _
    %v64 = vld [vmem:[#allocation2] sm:$0xff]
    %v65 = vld [vmem:[#allocation2 + $0x8] sm:$0xff]
    %v66 = vld [vmem:[#allocation5] sm:$0x3]
    %v67 = vld [vmem:[%s2] sm:$0x3]
    %v68 = vld [vmem:[%s3] sm:$0x3]
    %v69 = vunpack.c.l.bf16 %v64
    %v70 = vunpack.c.h.bf16 %v64
    %v71 = vunpack.c.l.bf16 %v65
    %v72 = vunpack.c.h.bf16 %v65
    %73 = vrot.lane.b32.xlu0 %v69, 127
    %v74 = vpop.permute.xlu0 %73
    %75 = vrot.lane.b32.xlu0 %v71, 127
    %v76 = vpop.permute.xlu0 %75
    %77 = vrot.lane.b32.xlu0 %v70, 127
    %v78 = vpop.permute.xlu0 %77
    %79 = vrot.lane.b32.xlu0 %v72, 127
    %v80 = vpop.permute.xlu0 %79
    %v81 = vlaneseq
    %v82 = vand.u32 %v81, 127
    %vm83 = vcmp.lt.s32.totalorder %v82, 127
    %v84 = vsel %vm83, %v74, %v78
    %v85 = vsel %vm83, %v76, %v80
    %v86 = vsel %vm83, %v78, %v74
    %v87 = vsel %vm83, %v80, %v76
    %88 = vrot.lane.b32.xlu0 %v69, 1
    %v89 = vpop.permute.xlu0 %88
    %90 = vrot.lane.b32.xlu0 %v71, 1
    %v91 = vpop.permute.xlu0 %90
    %92 = vrot.lane.b32.xlu0 %v70, 1
    %v93 = vpop.permute.xlu0 %92
    %94 = vrot.lane.b32.xlu0 %v72, 1
    %v95 = vpop.permute.xlu0 %94
    %vm96 = vcmp.lt.s32.totalorder %v82, 1
    %v97 = vsel %vm96, %v89, %v93
    %v98 = vsel %vm96, %v91, %v95
    %v99 = vsel %vm96, %v93, %v89
    %v100 = vsel %vm96, %v95, %v91
    %v102 = vlaneseq
    %v103 = vshrl.u32 %v102, 7
    %v104 = vsub.s32 0, %v103
    %v105 = vrot.slane %v66, %v104
    %v106 = vlaneseq
    %v107 = vshrl.u32 %v106, 7
    %v108 = vsub.s32 1, %v107
    %v109 = vrot.slane %v66, %v108
    %v112 = vmul.f32 %v105, %v69
    %v113 = vmul.f32 %v109, %v70
    %v114 = vmul.f32 %v105, %v71
    %v115 = vmul.f32 %v109, %v72
    %v117 = vlaneseq
    %v118 = vshrl.u32 %v117, 7
    %v119 = vsub.s32 0, %v118
    %v120 = vrot.slane %v67, %v119
    %v121 = vlaneseq
    %v122 = vshrl.u32 %v121, 7
    %v123 = vsub.s32 1, %v122
    %v124 = vrot.slane %v67, %v123
    %v127 = vmul.f32 %v120, %v84
    %v128 = vmul.f32 %v124, %v86
    %v129 = vmul.f32 %v120, %v85
    %v130 = vmul.f32 %v124, %v87
    %v131 = vadd.f32 %v112, %v127
    %v132 = vadd.f32 %v113, %v128
    %v133 = vadd.f32 %v114, %v129
    %v134 = vadd.f32 %v115, %v130
    %v136 = vlaneseq
    %v137 = vshrl.u32 %v136, 7
    %v138 = vsub.s32 0, %v137
    %v139 = vrot.slane %v68, %v138
    %v140 = vlaneseq
    %v141 = vshrl.u32 %v140, 7
    %v142 = vsub.s32 1, %v141
    %v143 = vrot.slane %v68, %v142
    %v146 = vmul.f32 %v139, %v99
    %v147 = vmul.f32 %v143, %v97
    %v148 = vmul.f32 %v139, %v100
    %v149 = vmul.f32 %v143, %v98
    %v150 = vadd.f32 %v131, %v146
    %v151 = vadd.f32 %v132, %v147
    %v152 = vadd.f32 %v133, %v148
    %v153 = vadd.f32 %v134, %v149
    %v154 = vpack.c.bf16 %v152, %v150
    %v155 = vpack.c.bf16 %v153, %v151
    %v156 = vld [vmem:[#allocation7] sm:$0xf]
    %v157 = vld [vmem:[#allocation7 + $0x4] sm:$0xf]
    %v158 = vld [vmem:[#allocation7 + $0x8] sm:$0xf]
    %v159 = vld [vmem:[#allocation7 + $0xc] sm:$0xf]
    %v160 = vld [vmem:[#allocation7 + $0x10] sm:$0xf]
    %v161 = vld [vmem:[#allocation7 + $0x14] sm:$0xf]
    %v162 = vld [vmem:[#allocation7 + $0x18] sm:$0xf]
    %v163 = vld [vmem:[#allocation7 + $0x1c] sm:$0xf]
    %v164 = vld [vmem:[#allocation7 + $0x20] sm:$0xf]
    %v165 = vld [vmem:[#allocation7 + $0x24] sm:$0xf]
    %v166 = vld [vmem:[#allocation7 + $0x28] sm:$0xf]
    %v167 = vld [vmem:[#allocation7 + $0x2c] sm:$0xf]
    %v168 = vld [vmem:[#allocation7 + $0x30] sm:$0xf]
    %v169 = vld [vmem:[#allocation7 + $0x34] sm:$0xf]
    %v170 = vld [vmem:[#allocation7 + $0x38] sm:$0xf]
    %v171 = vld [vmem:[#allocation7 + $0x3c] sm:$0xf]
    %v172 = vld [vmem:[#allocation7 + $0x40] sm:$0xf]
    %v173 = vld [vmem:[#allocation7 + $0x44] sm:$0xf]
    %v174 = vld [vmem:[#allocation7 + $0x48] sm:$0xf]
    %v175 = vld [vmem:[#allocation7 + $0x4c] sm:$0xf]
    %v176 = vld [vmem:[#allocation7 + $0x50] sm:$0xf]
    %v177 = vld [vmem:[#allocation7 + $0x54] sm:$0xf]
    %v178 = vld [vmem:[#allocation7 + $0x58] sm:$0xf]
    %v179 = vld [vmem:[#allocation7 + $0x5c] sm:$0xf]
    %v180 = vld [vmem:[#allocation7 + $0x60] sm:$0xf]
    %v181 = vld [vmem:[#allocation7 + $0x64] sm:$0xf]
    %v182 = vld [vmem:[#allocation7 + $0x68] sm:$0xf]
    %v183 = vld [vmem:[#allocation7 + $0x6c] sm:$0xf]
    %v184 = vld [vmem:[#allocation7 + $0x70] sm:$0xf]
    %v185 = vld [vmem:[#allocation7 + $0x74] sm:$0xf]
    %v186 = vld [vmem:[#allocation7 + $0x78] sm:$0xf]
    %v187 = vld [vmem:[#allocation7 + $0x7c] sm:$0xf]
    %v188 = vld [vmem:[%s5] sm:$0x1]
    %v190 = vlaneseq
    %v191 = vshrl.u32 %v190, 7
    %v192 = vsub.s32 0, %v191
    %v193 = vrot.slane %v188, %v192
    %v227 = vunpack.c.l.b16 %v156
    %v228 = vunpack.c.l.b16 %v157
    %v229 = vunpack.c.l.b16 %v158
    %v230 = vunpack.c.l.b16 %v159
    %v231 = vunpack.c.l.b16 %v160
    %v232 = vunpack.c.l.b16 %v161
    %v233 = vunpack.c.l.b16 %v162
    %v234 = vunpack.c.l.b16 %v163
    %v235 = vunpack.c.l.b16 %v164
    %v236 = vunpack.c.l.b16 %v165
    %v237 = vunpack.c.l.b16 %v166
    %v238 = vunpack.c.l.b16 %v167
    %v239 = vunpack.c.l.b16 %v168
    %v240 = vunpack.c.l.b16 %v169
    %v241 = vunpack.c.l.b16 %v170
    %v242 = vunpack.c.l.b16 %v171
    %v243 = vunpack.c.l.b16 %v172
    %v244 = vunpack.c.l.b16 %v173
    %v245 = vunpack.c.l.b16 %v174
    %v246 = vunpack.c.l.b16 %v175
    %v247 = vunpack.c.l.b16 %v176
    %v248 = vunpack.c.l.b16 %v177
    %v249 = vunpack.c.l.b16 %v178
    %v250 = vunpack.c.l.b16 %v179
    %v251 = vunpack.c.l.b16 %v180
    %v252 = vunpack.c.l.b16 %v181
    %v253 = vunpack.c.l.b16 %v182
    %v254 = vunpack.c.l.b16 %v183
    %v255 = vunpack.c.l.b16 %v184
    %v256 = vunpack.c.l.b16 %v185
    %v257 = vunpack.c.l.b16 %v186
    %v258 = vunpack.c.l.b16 %v187
    %v259 = vpack.c.b16 %v228, %v227
    %v260 = vpack.c.b16 %v230, %v229
    %v261 = vpack.c.b16 %v232, %v231
    %v262 = vpack.c.b16 %v234, %v233
    %v263 = vpack.c.b16 %v236, %v235
    %v264 = vpack.c.b16 %v238, %v237
    %v265 = vpack.c.b16 %v240, %v239
    %v266 = vpack.c.b16 %v242, %v241
    %v267 = vpack.c.b16 %v244, %v243
    %v268 = vpack.c.b16 %v246, %v245
    %v269 = vpack.c.b16 %v248, %v247
    %v270 = vpack.c.b16 %v250, %v249
    %v271 = vpack.c.b16 %v252, %v251
    %v272 = vpack.c.b16 %v254, %v253
    %v273 = vpack.c.b16 %v256, %v255
    %v274 = vpack.c.b16 %v258, %v257
    %291 = vmatprep.subr.bf16.mxu0 0
    %292 = vmatpush1.bf16.msra.mxu0 %v266
    %293 = vmatprep.subr.bf16.mxu0 0
    %294 = vmatpush1.bf16.msra.mxu0 %v265
    %295 = vmatprep.subr.bf16.mxu0 0
    %296 = vmatpush1.bf16.msra.mxu0 %v264
    %297 = vmatprep.subr.bf16.mxu0 0
    %298 = vmatpush1.bf16.msra.mxu0 %v263
    %299 = vmatprep.subr.bf16.mxu0 0
    %300 = vmatpush1.bf16.msra.mxu0 %v262
    %301 = vmatprep.subr.bf16.mxu0 0
    %302 = vmatpush1.bf16.msra.mxu0 %v261
    %303 = vmatprep.subr.bf16.mxu0 0
    %304 = vmatpush1.bf16.msra.mxu0 %v260
    %305 = vmatprep.subr.bf16.mxu0 0
    %306 = vmatpush1.bf16.msra.mxu0 %v259
    %307 = vmatprep.subr.bf16.mxu0 0
    %308 = vmatpush2.bf16.msra.mxu0 %v274
    %309 = vmatprep.subr.bf16.mxu0 0
    %310 = vmatpush2.bf16.msra.mxu0 %v273
    %311 = vmatprep.subr.bf16.mxu0 0
    %312 = vmatpush2.bf16.msra.mxu0 %v272
    %313 = vmatprep.subr.bf16.mxu0 0
    %314 = vmatpush2.bf16.msra.mxu0 %v271
    %315 = vmatprep.subr.bf16.mxu0 0
    %316 = vmatpush2.bf16.msra.mxu0 %v270
    %317 = vmatprep.subr.bf16.mxu0 0
    %318 = vmatpush2.bf16.msra.mxu0 %v269
    %319 = vmatprep.subr.bf16.mxu0 0
    %320 = vmatpush2.bf16.msra.mxu0 %v268
    %321 = vmatprep.subr.bf16.mxu0 0
    %322 = vmatpush2.bf16.msra.mxu0 %v267
    %323 = vmatprep.mubr.bf16.mxu0 %v155
    %324 = vmatmul.mubr.bf16.gmra.mxu0 %v154
    %v325 = vpop.f32.mrf.mxu0
    %v326 = vadd.f32 %v193, %v325
    %v327 = vpop.f32.mrf.mxu0
    %v328 = vpop.f32.mrf.mxu0
    %v329 = vadd.f32 %v193, %v328
    %v330 = vpop.f32.mrf.mxu0
    %331 = vdwg.mxu0
    %332 = vst [vmem:[#allocation8] sm:$0xff] %v326
    %333 = vst [vmem:[#allocation8 + $0x8] sm:$0xff] %v329
    // Predicated region
    $region38: #{tpu_custom_call.1} parent=1 // pred_check
      _
    $region39: #{tpu_custom_call.1} parent=1 // pred_check_branch
      %335 = sbr.rel (0) target = $region41
    $region40: #{tpu_custom_call.1} parent=1 // pred_region
      %s337 = ssub.s32 256, 256
      %338 = vsyncadd [#allocation4], %s337
      %s339 = sshll.u32 [#allocation8], 4
      %s340 = int_to_ptr.vmem [resolvable:$true] %s339
      %345 = dma.vmem_to_hbm [thread:$0]  %s340, 256, %s6, [#allocation4], 128, 128, 8
    $region41: #{tpu_custom_call.1} parent=1 // pred_fallthru
      _
    // Predicated region
    $region42: #{tpu_custom_call.1} parent=1 // pred_check
      _
    $region43: #{tpu_custom_call.1} parent=1 // pred_check_branch
      %347 = sbr.rel (0) target = $region45
    $region44: #{tpu_custom_call.1} parent=1 // pred_region
      %348 = dma.done [#allocation4], 256
    $region45: #{tpu_custom_call.1} parent=1 // pred_fallthru
      _
    %349 = vsyncpa [#allocation3], 1
    %350 = vsyncpa [#allocation6], 1
    %351 = vsyncpa [#allocation4], 1

</llo_original>
